<compile_context>
chip_gen: v7x
topology: tpu7x:2x2x1
jax: 0.10.0
libtpu: 0.0.40
codegen_flags: <defaults>
</compile_context>

<pallas_src>
import functools

import jax
import jax.numpy as jnp
from jax.experimental import pallas as pl
from jax.experimental.pallas import tpu as pltpu


def _round_up(x, m):
    return (x + m - 1) // m * m


def _gated_conv_stats_kernel(patches_ref, w_ref, b_ref,
                             g_ref, sum_ref, sumsq_ref,
                             *, cp, tile_m, total_rows):
    """Pass 1, one M-tile: fused (conv|mask) matmul + bias, LeakyReLU(0.4),
    sigmoid gating, and per-channel sum / sum-of-squares accumulation."""
    @pl.when(pl.program_id(0) == 0)
    def _():
        sum_ref[...] = jnp.zeros_like(sum_ref)
        sumsq_ref[...] = jnp.zeros_like(sumsq_ref)

    # Single MXU pass: bf16 inputs, f32 accumulation.
    xm = jnp.dot(patches_ref[...], w_ref[...],
                 preferred_element_type=jnp.float32) + b_ref[...]
    x = xm[:, :cp]                             # conv branch
    m = xm[:, cp:]                             # mask branch
    x = jnp.where(x >= 0.0, x, 0.4 * x)        # LeakyReLU(negative_slope=0.4)
    g = x * jax.nn.sigmoid(m)                  # gating
    g_ref[...] = g

    # Exclude zero-padded rows of M from the BN statistics (last tile only).
    row = pl.program_id(0) * tile_m + jax.lax.broadcasted_iota(
        jnp.int32, (tile_m, 1), 0)
    gm = jnp.where(row < total_rows, g, 0.0)
    sum_ref[...] += jnp.sum(gm, axis=0, keepdims=True)
    sumsq_ref[...] += jnp.sum(gm * gm, axis=0, keepdims=True)


def _bn_apply_kernel(g_ref, sum_ref, sumsq_ref, gamma_ref, beta_ref, out_ref,
                     *, count, eps):
    """Pass 2, one M-tile: apply BatchNorm with the global batch statistics."""
    inv_n = 1.0 / count
    mean = sum_ref[...] * inv_n
    var = jnp.maximum(sumsq_ref[...] * inv_n - mean * mean, 0.0)   # biased var
    scale = gamma_ref[...] * jax.lax.rsqrt(var + eps)
    shift = beta_ref[...] - mean * scale
    out_ref[...] = g_ref[...] * scale + shift


def _im2col(x_nchw, kh, kw, stride, padding):
    """(N, C, H, W) -> (N*Ho*Wo, C*kh*kw), K ordered (c, i, j) to match the
    flattened PyTorch conv weight layout (O, C, kh, kw)."""
    xp = jnp.pad(x_nchw, ((0, 0), (0, 0), (padding, padding), (padding, padding)))
    N, C, Hp, Wp = xp.shape
    Ho = (Hp - kh) // stride + 1
    Wo = (Wp - kw) // stride + 1
    cols = []
    for i in range(kh):
        for j in range(kw):
            cols.append(xp[:, :, i:i + (Ho - 1) * stride + 1:stride,
                               j:j + (Wo - 1) * stride + 1:stride])
    patches = jnp.stack(cols, axis=2)                        # (N, C, kh*kw, Ho, Wo)
    patches = patches.transpose(0, 3, 4, 1, 2).reshape(N * Ho * Wo, C * kh * kw)
    return patches, Ho, Wo


@functools.partial(jax.jit,
                   static_argnames=("kernel_size", "stride", "padding", "tile_m"))
def gated_conv2d_with_activation(x_nchw, wx, bx, wm, bm, gamma, beta,
                                 kernel_size=3, stride=1, padding=1,
                                 tile_m=512):
    """x_nchw: (N, Cin, H, W); wx/wm: (Cout, Cin, kh, kw); bx/bm/gamma/beta: (Cout,)."""
    N, Cin, H, W = x_nchw.shape
    Cout = wx.shape[0]
    kh = kw = kernel_size
    K = Cin * kh * kw
    f32 = jnp.float32

    # TODO(synk): move patch extraction in-kernel (halo DMA of NHWC tiles) to cut
    # the kh*kw x im2col HBM expansion; patches are at least emitted in bf16.
    patches, Ho, Wo = _im2col(x_nchw.astype(jnp.bfloat16), kh, kw, stride, padding)
    M = N * Ho * Wo

    tile_m = min(tile_m, _round_up(M, 8))
    num_tiles = pl.cdiv(M, tile_m)
    m_pad = num_tiles * tile_m
    patches = jnp.pad(patches, ((0, m_pad - M), (0, 0)))

    # Lane-dense channel padding + fused (conv | mask) weights -> one matmul.
    cp = _round_up(Cout, 128)
    wx_mat = wx.reshape(Cout, K).T.astype(f32)
    wm_mat = wm.reshape(Cout, K).T.astype(f32)
    w_fused = jnp.zeros((K, 2 * cp), f32)
    w_fused = w_fused.at[:, :Cout].set(wx_mat)
    w_fused = w_fused.at[:, cp:cp + Cout].set(wm_mat)
    w_fused = w_fused.astype(jnp.bfloat16)

    b_fused = jnp.zeros((1, 2 * cp), f32)
    b_fused = b_fused.at[0, :Cout].set(bx.astype(f32))
    b_fused = b_fused.at[0, cp:cp + Cout].set(bm.astype(f32))

    gamma_row = jnp.zeros((1, cp), f32).at[0, :Cout].set(gamma.astype(f32))
    beta_row = jnp.zeros((1, cp), f32).at[0, :Cout].set(beta.astype(f32))

    # ---- Pass 1: gated conv + per-channel sum / sumsq over all M rows. ----
    cost1 = pl.CostEstimate(
        flops=2 * m_pad * K * (2 * cp) + 8 * m_pad * cp,
        transcendentals=m_pad * cp,
        bytes_accessed=m_pad * K * 2 + K * 2 * cp * 2 + m_pad * cp * 4 + 6 * cp * 4)
    g_flat, ch_sum, ch_sumsq = pl.pallas_call(
        functools.partial(_gated_conv_stats_kernel,
                          cp=cp, tile_m=tile_m, total_rows=M),
        grid=(num_tiles,),
        in_specs=[
            pl.BlockSpec((tile_m, K), lambda i: (i, 0)),       # patch tile
            pl.BlockSpec((K, 2 * cp), lambda i: (0, 0)),       # fused weights (resident)
            pl.BlockSpec((1, 2 * cp), lambda i: (0, 0)),       # fused bias (resident)
        ],
        out_specs=(
            pl.BlockSpec((tile_m, cp), lambda i: (i, 0)),      # gated activation
            pl.BlockSpec((1, cp), lambda i: (0, 0)),           # channel sum (accum)
            pl.BlockSpec((1, cp), lambda i: (0, 0)),           # channel sumsq (accum)
        ),
        out_shape=(
            jax.ShapeDtypeStruct((m_pad, cp), f32),
            jax.ShapeDtypeStruct((1, cp), f32),
            jax.ShapeDtypeStruct((1, cp), f32),
        ),
        compiler_params=pltpu.CompilerParams(dimension_semantics=("arbitrary",)),
        cost_estimate=cost1,
    )(patches, w_fused, b_fused)

    # ---- Pass 2: apply BatchNorm with the global statistics. ----
    cost2 = pl.CostEstimate(
        flops=4 * m_pad * cp,
        transcendentals=num_tiles * cp,
        bytes_accessed=2 * m_pad * cp * 4 + 4 * cp * 4)
    out_flat = pl.pallas_call(
        functools.partial(_bn_apply_kernel, count=M, eps=1e-5),
        grid=(num_tiles,),
        in_specs=[
            pl.BlockSpec((tile_m, cp), lambda i: (i, 0)),
            pl.BlockSpec((1, cp), lambda i: (0, 0)),
            pl.BlockSpec((1, cp), lambda i: (0, 0)),
            pl.BlockSpec((1, cp), lambda i: (0, 0)),
            pl.BlockSpec((1, cp), lambda i: (0, 0)),
        ],
        out_specs=pl.BlockSpec((tile_m, cp), lambda i: (i, 0)),
        out_shape=jax.ShapeDtypeStruct((m_pad, cp), f32),
        compiler_params=pltpu.CompilerParams(dimension_semantics=("parallel",)),
        cost_estimate=cost2,
    )(g_flat, ch_sum, ch_sumsq, gamma_row, beta_row)

    # Drop row/channel padding, back to NCHW for interface parity with PyTorch.
    out = out_flat[:M, :Cout].reshape(N, Ho, Wo, Cout).transpose(0, 3, 1, 2)
    return out


if __name__ == "__main__":
    key = jax.random.PRNGKey(0)
    k_x, k_wx, k_bx, k_wm, k_bm = jax.random.split(key, 5)

    N, Cin, H, W = 2, 4, 16, 16
    Cout, ksz, stride, padding = 8, 3, 1, 1

    x = jax.random.normal(k_x, (N, Cin, H, W), dtype=jnp.float32)

    # Deterministic parameter init (synthetic; shapes match nn.Conv2d / BatchNorm2d).
    fan_in = Cin * ksz * ksz
    bound = 1.0 / (fan_in ** 0.5)
    wx = jax.random.uniform(k_wx, (Cout, Cin, ksz, ksz), minval=-bound, maxval=bound)
    bx = jax.random.uniform(k_bx, (Cout,), minval=-bound, maxval=bound)
    wm = jax.random.uniform(k_wm, (Cout, Cin, ksz, ksz), minval=-bound, maxval=bound)
    bm = jax.random.uniform(k_bm, (Cout,), minval=-bound, maxval=bound)
    gamma = jnp.ones((Cout,), jnp.float32)   # BatchNorm2d default weight
    beta = jnp.zeros((Cout,), jnp.float32)   # BatchNorm2d default bias

    # tile_m=128 at this small demo size so the multi-tile grid and the
    # BatchNorm sum/sumsq accumulation path are exercised (4 grid steps).
    out = gated_conv2d_with_activation(x, wx, bx, wm, bm, gamma, beta,
                                       kernel_size=ksz, stride=stride,
                                       padding=padding, tile_m=128)
    jax.block_until_ready(out)
    assert out.shape == (N, Cout, H, W), out.shape
    assert bool(jnp.all(jnp.isfinite(out)))
    print("KERNEL_OK")
</pallas_src>

<mosaic_0001>
module attributes {stable_mosaic.version = 11 : i64} {
  func.func @_gated_conv_stats_kernel(%arg0: i32, %arg1: memref<128x36xbf16, #tpu.memory_space<vmem>>, %arg2: memref<36x256xbf16, #tpu.memory_space<vmem>>, %arg3: memref<1x256xf32, #tpu.memory_space<vmem>>, %arg4: memref<128x128xf32, #tpu.memory_space<vmem>>, %arg5: memref<1x128xf32, #tpu.memory_space<vmem>>, %arg6: memref<1x128xf32, #tpu.memory_space<vmem>>) attributes {dimension_semantics = [#tpu.dimension_semantics<arbitrary>], iteration_bounds = array<i64: 4>, scalar_prefetch = 0 : i64, scratch_operands = 0 : i64, tpu.core_type = #tpu.core_type<tc>, window_params = [{transform_indices = @transform_0, window_bounds = array<i64: 128, 36>}, {pipeline_mode = #tpu.pipeline_mode<synchronous>, transform_indices = @transform_1, window_bounds = array<i64: 36, 256>}, {pipeline_mode = #tpu.pipeline_mode<synchronous>, transform_indices = @transform_2, window_bounds = array<i64: 1, 256>}, {transform_indices = @transform_3, window_bounds = array<i64: 128, 128>}, {pipeline_mode = #tpu.pipeline_mode<synchronous>, transform_indices = @transform_4, window_bounds = array<i64: 1, 128>}, {pipeline_mode = #tpu.pipeline_mode<synchronous>, transform_indices = @transform_5, window_bounds = array<i64: 1, 128>}]} {
    %c0_i32 = arith.constant 0 : i32
    %0 = arith.cmpi eq, %arg0, %c0_i32 : i32
    %1 = arith.extui %0 : i1 to i32
    %c0_i32_0 = arith.constant 0 : i32
    %2 = arith.cmpi ne, %1, %c0_i32_0 : i32
    scf.if %2 {
      %cst_22 = arith.constant 0.000000e+00 : f32
      %44 = vector.broadcast %cst_22 : f32 to vector<1x128xf32>
      %c0_23 = arith.constant 0 : index
      %c0_24 = arith.constant 0 : index
      %45 = vector.load %arg5[%c0_23, %c0_24] : memref<1x128xf32, #tpu.memory_space<vmem>>, vector<1x128xf32>
      tpu.vector_store %arg5[%c0_23, %c0_24], %44 {strides = array<i32>} : memref<1x128xf32, #tpu.memory_space<vmem>>, vector<1x128xf32>,
      %cst_25 = arith.constant 0.000000e+00 : f32
      %46 = vector.broadcast %cst_25 : f32 to vector<1x128xf32>
      %c0_26 = arith.constant 0 : index
      %c0_27 = arith.constant 0 : index
      %47 = vector.load %arg6[%c0_26, %c0_27] : memref<1x128xf32, #tpu.memory_space<vmem>>, vector<1x128xf32>
      tpu.vector_store %arg6[%c0_26, %c0_27], %46 {strides = array<i32>} : memref<1x128xf32, #tpu.memory_space<vmem>>, vector<1x128xf32>,
    } else {
    }
    %c0 = arith.constant 0 : index
    %c0_1 = arith.constant 0 : index
    %3 = vector.load %arg1[%c0, %c0_1] : memref<128x36xbf16, #tpu.memory_space<vmem>>, vector<128x36xbf16>
    %c0_2 = arith.constant 0 : index
    %c0_3 = arith.constant 0 : index
    %4 = vector.load %arg2[%c0_2, %c0_3] : memref<36x256xbf16, #tpu.memory_space<vmem>>, vector<36x256xbf16>
    %cst = arith.constant dense<0.000000e+00> : vector<128x256xf32>
    %5 = tpu.matmul %3, %4, %cst {dimension_numbers = #tpu.dot_dimension_numbers<[1], [0], [0], [1], [0, 0, 1, 1], [], []>} : vector<128x36xbf16>, vector<36x256xbf16>, vector<128x256xf32> -> vector<128x256xf32>
    %c0_4 = arith.constant 0 : index
    %c0_5 = arith.constant 0 : index
    %6 = vector.load %arg3[%c0_4, %c0_5] : memref<1x256xf32, #tpu.memory_space<vmem>>, vector<1x256xf32>
    %7 = vector.broadcast %6 : vector<1x256xf32> to vector<128x256xf32>
    %8 = arith.addf %5, %7 : vector<128x256xf32>
    %9 = vector.extract_strided_slice %8 {offsets = [0, 0], sizes = [128, 128], strides = [1, 1]} : vector<128x256xf32> to vector<128x128xf32>
    %10 = vector.extract_strided_slice %8 {offsets = [0, 128], sizes = [128, 128], strides = [1, 1]} : vector<128x256xf32> to vector<128x128xf32>
    %cst_6 = arith.constant 0.000000e+00 : f32
    %11 = vector.broadcast %cst_6 : f32 to vector<128x128xf32>
    %12 = arith.cmpf oge, %9, %11 : vector<128x128xf32>
    %cst_7 = arith.constant 4.000000e-01 : f32
    %13 = vector.broadcast %cst_7 : f32 to vector<128x128xf32>
    %14 = arith.mulf %13, %9 : vector<128x128xf32>
    %15 = arith.select %12, %9, %14 : vector<128x128xi1>, vector<128x128xf32>
    %16 = arith.negf %10 : vector<128x128xf32>
    %17 = math.exp %16 : vector<128x128xf32>
    %cst_8 = arith.constant 1.000000e+00 : f32
    %18 = vector.broadcast %cst_8 : f32 to vector<128x128xf32>
    %19 = arith.addf %18, %17 : vector<128x128xf32>
    %20 = arith.divf %18, %19 : vector<128x128xf32>
    %21 = arith.mulf %15, %20 : vector<128x128xf32>
    %c0_9 = arith.constant 0 : index
    %c0_10 = arith.constant 0 : index
    %22 = vector.load %arg4[%c0_9, %c0_10] : memref<128x128xf32, #tpu.memory_space<vmem>>, vector<128x128xf32>
    tpu.vector_store %arg4[%c0_9, %c0_10], %21 {strides = array<i32>} : memref<128x128xf32, #tpu.memory_space<vmem>>, vector<128x128xf32>,
    %c128_i32 = arith.constant 128 : i32
    %23 = arith.muli %arg0, %c128_i32 : i32
    %24 = tpu.iota {dimensions = array<i32: 0>} : vector<128x1xi32>
    %25 = vector.broadcast %23 : i32 to vector<128x1xi32>
    %26 = arith.addi %25, %24 : vector<128x1xi32>
    %c512_i32 = arith.constant 512 : i32
    %27 = vector.broadcast %c512_i32 : i32 to vector<128x1xi32>
    %28 = arith.cmpi slt, %26, %27 : vector<128x1xi32>
    %cst_11 = arith.constant 0.000000e+00 : f32
    %29 = vector.shape_cast %28 : vector<128x1xi1> to vector<128x1xi1>
    %30 = vector.broadcast %29 : vector<128x1xi1> to vector<128x128xi1>
    %31 = vector.broadcast %cst_11 : f32 to vector<128x128xf32>
    %32 = arith.select %30, %21, %31 : vector<128x128xi1>, vector<128x128xf32>
    %c0_12 = arith.constant 0 : index
    %c0_13 = arith.constant 0 : index
    %33 = vector.load %arg5[%c0_12, %c0_13] : memref<1x128xf32, #tpu.memory_space<vmem>>, vector<1x128xf32>
    %cst_14 = arith.constant dense<0.000000e+00> : vector<128xf32>
    %34 = vector.multi_reduction <add>, %32, %cst_14 [0] : vector<128x128xf32> to vector<128xf32>
    %35 = vector.shape_cast %34 : vector<128xf32> to vector<1x128xf32>
    %36 = arith.addf %33, %35 : vector<1x128xf32>
    %c0_15 = arith.constant 0 : index
    %c0_16 = arith.constant 0 : index
    %37 = vector.load %arg5[%c0_15, %c0_16] : memref<1x128xf32, #tpu.memory_space<vmem>>, vector<1x128xf32>
    tpu.vector_store %arg5[%c0_15, %c0_16], %36 {strides = array<i32>} : memref<1x128xf32, #tpu.memory_space<vmem>>, vector<1x128xf32>,
    %c0_17 = arith.constant 0 : index
    %c0_18 = arith.constant 0 : index
    %38 = vector.load %arg6[%c0_17, %c0_18] : memref<1x128xf32, #tpu.memory_space<vmem>>, vector<1x128xf32>
    %39 = arith.mulf %32, %32 : vector<128x128xf32>
    %cst_19 = arith.constant dense<0.000000e+00> : vector<128xf32>
    %40 = vector.multi_reduction <add>, %39, %cst_19 [0] : vector<128x128xf32> to vector<128xf32>
    %41 = vector.shape_cast %40 : vector<128xf32> to vector<1x128xf32>
    %42 = arith.addf %38, %41 : vector<1x128xf32>
    %c0_20 = arith.constant 0 : index
    %c0_21 = arith.constant 0 : index
    %43 = vector.load %arg6[%c0_20, %c0_21] : memref<1x128xf32, #tpu.memory_space<vmem>>, vector<1x128xf32>
    tpu.vector_store %arg6[%c0_20, %c0_21], %42 {strides = array<i32>} : memref<1x128xf32, #tpu.memory_space<vmem>>, vector<1x128xf32>,
    return
  }
  func.func @transform_0(%arg0: i32) -> (i32, i32) {
    %c0_i32 = arith.constant 0 : i32
    %c0_i32_0 = arith.constant 0 : i32
    return %arg0, %c0_i32 : i32, i32
  }
  func.func @transform_1(%arg0: i32) -> (i32, i32) {
    %c0_i32 = arith.constant 0 : i32
    %c0_i32_0 = arith.constant 0 : i32
    %c0_i32_1 = arith.constant 0 : i32
    return %c0_i32, %c0_i32_0 : i32, i32
  }
  func.func @transform_2(%arg0: i32) -> (i32, i32) {
    %c0_i32 = arith.constant 0 : i32
    %c0_i32_0 = arith.constant 0 : i32
    %c0_i32_1 = arith.constant 0 : i32
    return %c0_i32, %c0_i32_0 : i32, i32
  }
  func.func @transform_3(%arg0: i32) -> (i32, i32) {
    %c0_i32 = arith.constant 0 : i32
    %c0_i32_0 = arith.constant 0 : i32
    return %arg0, %c0_i32 : i32, i32
  }
  func.func @transform_4(%arg0: i32) -> (i32, i32) {
    %c0_i32 = arith.constant 0 : i32
    %c0_i32_0 = arith.constant 0 : i32
    %c0_i32_1 = arith.constant 0 : i32
    return %c0_i32, %c0_i32_0 : i32, i32
  }
  func.func @transform_5(%arg0: i32) -> (i32, i32) {
    %c0_i32 = arith.constant 0 : i32
    %c0_i32_0 = arith.constant 0 : i32
    %c0_i32_1 = arith.constant 0 : i32
    return %c0_i32, %c0_i32_0 : i32, i32
  }
}

module attributes {stable_mosaic.version = 11 : i64} {
  func.func @_bn_apply_kernel(%arg0: i32, %arg1: memref<128x128xf32, #tpu.memory_space<vmem>>, %arg2: memref<1x128xf32, #tpu.memory_space<vmem>>, %arg3: memref<1x128xf32, #tpu.memory_space<vmem>>, %arg4: memref<1x128xf32, #tpu.memory_space<vmem>>, %arg5: memref<1x128xf32, #tpu.memory_space<vmem>>, %arg6: memref<128x128xf32, #tpu.memory_space<vmem>>) attributes {dimension_semantics = [#tpu.dimension_semantics<parallel>], iteration_bounds = array<i64: 4>, scalar_prefetch = 0 : i64, scratch_operands = 0 : i64, tpu.core_type = #tpu.core_type<tc>, window_params = [{transform_indices = @transform_0, window_bounds = array<i64: 128, 128>}, {pipeline_mode = #tpu.pipeline_mode<synchronous>, transform_indices = @transform_1, window_bounds = array<i64: 1, 128>}, {pipeline_mode = #tpu.pipeline_mode<synchronous>, transform_indices = @transform_2, window_bounds = array<i64: 1, 128>}, {pipeline_mode = #tpu.pipeline_mode<synchronous>, transform_indices = @transform_3, window_bounds = array<i64: 1, 128>}, {pipeline_mode = #tpu.pipeline_mode<synchronous>, transform_indices = @transform_4, window_bounds = array<i64: 1, 128>}, {transform_indices = @transform_5, window_bounds = array<i64: 128, 128>}]} {
    %c0 = arith.constant 0 : index
    %c0_0 = arith.constant 0 : index
    %0 = vector.load %arg2[%c0, %c0_0] : memref<1x128xf32, #tpu.memory_space<vmem>>, vector<1x128xf32>
    %cst = arith.constant 0.001953125 : f32
    %1 = vector.broadcast %cst : f32 to vector<1x128xf32>
    %2 = arith.mulf %0, %1 : vector<1x128xf32>
    %c0_1 = arith.constant 0 : index
    %c0_2 = arith.constant 0 : index
    %3 = vector.load %arg3[%c0_1, %c0_2] : memref<1x128xf32, #tpu.memory_space<vmem>>, vector<1x128xf32>
    %cst_3 = arith.constant 0.001953125 : f32
    %4 = vector.broadcast %cst_3 : f32 to vector<1x128xf32>
    %5 = arith.mulf %3, %4 : vector<1x128xf32>
    %6 = arith.mulf %2, %2 : vector<1x128xf32>
    %7 = arith.subf %5, %6 : vector<1x128xf32>
    %cst_4 = arith.constant 0.000000e+00 : f32
    %8 = vector.broadcast %cst_4 : f32 to vector<1x128xf32>
    %9 = arith.maximumf %7, %8 : vector<1x128xf32>
    %c0_5 = arith.constant 0 : index
    %c0_6 = arith.constant 0 : index
    %10 = vector.load %arg4[%c0_5, %c0_6] : memref<1x128xf32, #tpu.memory_space<vmem>>, vector<1x128xf32>
    %cst_7 = arith.constant 9.99999974E-6 : f32
    %11 = vector.broadcast %cst_7 : f32 to vector<1x128xf32>
    %12 = arith.addf %9, %11 : vector<1x128xf32>
    %13 = math.rsqrt %12 : vector<1x128xf32>
    %14 = arith.mulf %10, %13 : vector<1x128xf32>
    %c0_8 = arith.constant 0 : index
    %c0_9 = arith.constant 0 : index
    %15 = vector.load %arg5[%c0_8, %c0_9] : memref<1x128xf32, #tpu.memory_space<vmem>>, vector<1x128xf32>
    %16 = arith.mulf %2, %14 : vector<1x128xf32>
    %17 = arith.subf %15, %16 : vector<1x128xf32>
    %c0_10 = arith.constant 0 : index
    %c0_11 = arith.constant 0 : index
    %18 = vector.load %arg1[%c0_10, %c0_11] : memref<128x128xf32, #tpu.memory_space<vmem>>, vector<128x128xf32>
    %19 = vector.broadcast %14 : vector<1x128xf32> to vector<128x128xf32>
    %20 = arith.mulf %18, %19 : vector<128x128xf32>
    %21 = vector.broadcast %17 : vector<1x128xf32> to vector<128x128xf32>
    %22 = arith.addf %20, %21 : vector<128x128xf32>
    %c0_12 = arith.constant 0 : index
    %c0_13 = arith.constant 0 : index
    %23 = vector.load %arg6[%c0_12, %c0_13] : memref<128x128xf32, #tpu.memory_space<vmem>>, vector<128x128xf32>
    tpu.vector_store %arg6[%c0_12, %c0_13], %22 {strides = array<i32>} : memref<128x128xf32, #tpu.memory_space<vmem>>, vector<128x128xf32>,
    return
  }
  func.func @transform_0(%arg0: i32) -> (i32, i32) {
    %c0_i32 = arith.constant 0 : i32
    %c0_i32_0 = arith.constant 0 : i32
    return %arg0, %c0_i32 : i32, i32
  }
  func.func @transform_1(%arg0: i32) -> (i32, i32) {
    %c0_i32 = arith.constant 0 : i32
    %c0_i32_0 = arith.constant 0 : i32
    %c0_i32_1 = arith.constant 0 : i32
    return %c0_i32, %c0_i32_0 : i32, i32
  }
  func.func @transform_2(%arg0: i32) -> (i32, i32) {
    %c0_i32 = arith.constant 0 : i32
    %c0_i32_0 = arith.constant 0 : i32
    %c0_i32_1 = arith.constant 0 : i32
    return %c0_i32, %c0_i32_0 : i32, i32
  }
  func.func @transform_3(%arg0: i32) -> (i32, i32) {
    %c0_i32 = arith.constant 0 : i32
    %c0_i32_0 = arith.constant 0 : i32
    %c0_i32_1 = arith.constant 0 : i32
    return %c0_i32, %c0_i32_0 : i32, i32
  }
  func.func @transform_4(%arg0: i32) -> (i32, i32) {
    %c0_i32 = arith.constant 0 : i32
    %c0_i32_0 = arith.constant 0 : i32
    %c0_i32_1 = arith.constant 0 : i32
    return %c0_i32, %c0_i32_0 : i32, i32
  }
  func.func @transform_5(%arg0: i32) -> (i32, i32) {
    %c0_i32 = arith.constant 0 : i32
    %c0_i32_0 = arith.constant 0 : i32
    return %arg0, %c0_i32 : i32, i32
  }
}

</mosaic_0001>

<llo_original>
// kernel: gated_conv2d_with_activation.3
$region0: #{gated_conv2d_with_activation.3}
  #allocation0 [shape = 'u32[]', space=smem, size = 0x4, offset = 0x4, fixed_abs, tag = 'smem constant byte address 0x4 - core index']
  #allocation1 [shape = 'u32[144,128]{1,0:T(1,128)}', space=vmem, size = 0x12000, scoped, tag = 'internal scratch']
  %s0 = inlined_call_operand.vmem [shape: f32[512,128], index: 0, kind: input, shape index: {}]
  %s1 = inlined_call_operand.vmem [shape: f32[1,128], index: 1, kind: input, shape index: {}]
  %s2 = inlined_call_operand.vmem [shape: f32[1,128], index: 2, kind: input, shape index: {}]
  %s3 = inlined_call_operand.vmem [shape: f32[1,128], index: 3, kind: input, shape index: {}]
  %s4 = inlined_call_operand.vmem [shape: f32[1,128], index: 4, kind: input, shape index: {}]
  %s5 = inlined_call_operand.vmem [shape: f32[512,128], index: 5, kind: output, shape index: {}]
  %s6 = sld [smem:[#allocation0]]
  $region53: #{gated_conv2d_with_activation.3} parent=0
    _
  %s8 = ssub.s32 1, %s6
  %s9 = scalar_select 0, %s8, %s6
  loop: start=0, step=1, limit=6
  $region2: #{gated_conv2d_with_activation.3} parent=0 // loop_pre_header
    _
  $region3: #{gated_conv2d_with_activation.3} parent=0 // loop_header
    %s11 = sphi 0, %s15
    %p12 = scmp.ge.s32.totalorder %s11, 6
    %s21 = sphi 0, %s23
    %s24 = sphi 0, %s21
    %s25 = sphi 0, %s24
    %s41 = sphi 0, %s25
    %s45 = sphi 0, %s45
    %s47 = sphi 0, %s45
    %s48 = sphi 0, %s47
    %s62 = sphi 0, %s48
    %s66 = sphi 0, %s66
    %s68 = sphi 0, %s66
    %s69 = sphi 0, %s68
    %s83 = sphi 0, %s69
    %s87 = sphi 0, %s87
    %s89 = sphi 0, %s87
    %s90 = sphi 0, %s89
    %s104 = sphi 0, %s90
    %s108 = sphi 0, %s108
    %s110 = sphi 0, %s108
    %s111 = sphi 0, %s110
    %s125 = sphi 0, %s111
    %s131 = sphi 0, %s133
    %s134 = sphi 0, %s131
    %s135 = sphi 0, %s134
    %s151 = sphi 0, %s135
  $region4: #{gated_conv2d_with_activation.3} parent=0 // loop_header_branch
    %14 = sbr.rel (%p12) target = $region8
  $region5: #{gated_conv2d_with_activation.3} parent=0 // loop_body
    %s16 = ssub.s32 %s11, 1
    %s17 = ssub.s32 %s11, 2
    %s18 = sadd.s32 %s11, 1
    %s19 = ssub.s32 %s11, %s18
    %p20 = scmp.eq.s32.totalorder %s19, 0
    %s22 = sadd.s32 %s21, 1
    %s23 = scalar_select %p20, %s21, %s22
    %p26 = pneg %p20
    %p27 = scmp.eq.s32.totalorder %s11, 3
    %p28 = por %p26, %p27
    %p29 = scmp.ne.s32.totalorder %s21, %s24
    %p30 = scmp.eq.s32.totalorder %s11, 0
    %p31 = por %p29, %p30
    %p32 = scmp.ne.s32.totalorder %s21, %s24
    %p33 = scmp.eq.s32.totalorder %s16, 3
    %p34 = por %p32, %p33
    %p35 = scmp.ne.s32.totalorder %s24, %s25
    %p36 = scmp.eq.s32.totalorder %s16, 0
    %p37 = por %p35, %p36
    %p38 = scmp.ne.s32.totalorder %s24, %s25
    %p39 = scmp.eq.s32.totalorder %s17, 3
    %p40 = por %p38, %p39
    %p42 = scmp.ne.s32.totalorder %s25, %s41
    %p43 = scmp.eq.s32.totalorder %s17, 0
    %p44 = por %p42, %p43
    %s46 = sadd.s32 %s45, 1
    %p49 = scmp.eq.s32.totalorder %s11, 3
    %p50 = scmp.ne.s32.totalorder %s45, %s47
    %p51 = scmp.eq.s32.totalorder %s11, 0
    %p52 = por %p50, %p51
    %p53 = scmp.ne.s32.totalorder %s45, %s47
    %p54 = scmp.eq.s32.totalorder %s16, 3
    %p55 = por %p53, %p54
    %p56 = scmp.ne.s32.totalorder %s47, %s48
    %p57 = scmp.eq.s32.totalorder %s16, 0
    %p58 = por %p56, %p57
    %p59 = scmp.ne.s32.totalorder %s47, %s48
    %p60 = scmp.eq.s32.totalorder %s17, 3
    %p61 = por %p59, %p60
    %p63 = scmp.ne.s32.totalorder %s48, %s62
    %p64 = scmp.eq.s32.totalorder %s17, 0
    %p65 = por %p63, %p64
    %s67 = sadd.s32 %s66, 1
    %p70 = scmp.eq.s32.totalorder %s11, 3
    %p71 = scmp.ne.s32.totalorder %s66, %s68
    %p72 = scmp.eq.s32.totalorder %s11, 0
    %p73 = por %p71, %p72
    %p74 = scmp.ne.s32.totalorder %s66, %s68
    %p75 = scmp.eq.s32.totalorder %s16, 3
    %p76 = por %p74, %p75
    %p77 = scmp.ne.s32.totalorder %s68, %s69
    %p78 = scmp.eq.s32.totalorder %s16, 0
    %p79 = por %p77, %p78
    %p80 = scmp.ne.s32.totalorder %s68, %s69
    %p81 = scmp.eq.s32.totalorder %s17, 3
    %p82 = por %p80, %p81
    %p84 = scmp.ne.s32.totalorder %s69, %s83
    %p85 = scmp.eq.s32.totalorder %s17, 0
    %p86 = por %p84, %p85
    %s88 = sadd.s32 %s87, 1
    %p91 = scmp.eq.s32.totalorder %s11, 3
    %p92 = scmp.ne.s32.totalorder %s87, %s89
    %p93 = scmp.eq.s32.totalorder %s11, 0
    %p94 = por %p92, %p93
    %p95 = scmp.ne.s32.totalorder %s87, %s89
    %p96 = scmp.eq.s32.totalorder %s16, 3
    %p97 = por %p95, %p96
    %p98 = scmp.ne.s32.totalorder %s89, %s90
    %p99 = scmp.eq.s32.totalorder %s16, 0
    %p100 = por %p98, %p99
    %p101 = scmp.ne.s32.totalorder %s89, %s90
    %p102 = scmp.eq.s32.totalorder %s17, 3
    %p103 = por %p101, %p102
    %p105 = scmp.ne.s32.totalorder %s90, %s104
    %p106 = scmp.eq.s32.totalorder %s17, 0
    %p107 = por %p105, %p106
    %s109 = sadd.s32 %s108, 1
    %p112 = scmp.eq.s32.totalorder %s11, 3
    %p113 = scmp.ne.s32.totalorder %s108, %s110
    %p114 = scmp.eq.s32.totalorder %s11, 0
    %p115 = por %p113, %p114
    %p116 = scmp.ne.s32.totalorder %s108, %s110
    %p117 = scmp.eq.s32.totalorder %s16, 3
    %p118 = por %p116, %p117
    %p119 = scmp.ne.s32.totalorder %s110, %s111
    %p120 = scmp.eq.s32.totalorder %s16, 0
    %p121 = por %p119, %p120
    %p122 = scmp.ne.s32.totalorder %s110, %s111
    %p123 = scmp.eq.s32.totalorder %s17, 3
    %p124 = por %p122, %p123
    %p126 = scmp.ne.s32.totalorder %s111, %s125
    %p127 = scmp.eq.s32.totalorder %s17, 0
    %p128 = por %p126, %p127
    %s129 = ssub.s32 %s11, %s18
    %p130 = scmp.eq.s32.totalorder %s129, 0
    %s132 = sadd.s32 %s131, 1
    %s133 = scalar_select %p130, %s131, %s132
    %p136 = pneg %p130
    %p137 = scmp.eq.s32.totalorder %s11, 3
    %p138 = por %p136, %p137
    %p139 = scmp.ne.s32.totalorder %s131, %s134
    %p140 = scmp.eq.s32.totalorder %s11, 0
    %p141 = por %p139, %p140
    %p142 = scmp.ne.s32.totalorder %s131, %s134
    %p143 = scmp.eq.s32.totalorder %s16, 3
    %p144 = por %p142, %p143
    %p145 = scmp.ne.s32.totalorder %s134, %s135
    %p146 = scmp.eq.s32.totalorder %s16, 0
    %p147 = por %p145, %p146
    %p148 = scmp.ne.s32.totalorder %s134, %s135
    %p149 = scmp.eq.s32.totalorder %s17, 3
    %p150 = por %p148, %p149
    %p152 = scmp.ne.s32.totalorder %s135, %s151
    %p153 = scmp.eq.s32.totalorder %s17, 0
    %p154 = por %p152, %p153
    %p155 = scmp.le.s32.totalorder 1, %s11
    %p156 = scmp.lt.s32.totalorder %s11, 5
    %p157 = pnand %p155, %p156
    %p158 = pneg %p157
    // Predicated region
    $region9: #{gated_conv2d_with_activation.3} parent=5 // pred_check
      _
    $region10: #{gated_conv2d_with_activation.3} parent=5 // pred_check_branch
      %160 = sbr.rel (%p157) target = $region12
    $region11: #{gated_conv2d_with_activation.3} parent=5 // pred_region
      %s161 = ssub.s32 %s11, 1
      // Predicated region
      $region13: #{gated_conv2d_with_activation.3} parent=11 // pred_check
        %p162 = pneg %p58
      $region14: #{gated_conv2d_with_activation.3} parent=11 // pred_check_branch
        %164 = sbr.rel (%p162) target = $region16
      $region15: #{gated_conv2d_with_activation.3} parent=11 // pred_region
        _
      $region16: #{gated_conv2d_with_activation.3} parent=11 // pred_fallthru
        _
      // Predicated region
      $region17: #{gated_conv2d_with_activation.3} parent=11 // pred_check
        %p165 = pneg %p79
      $region18: #{gated_conv2d_with_activation.3} parent=11 // pred_check_branch
        %167 = sbr.rel (%p165) target = $region20
      $region19: #{gated_conv2d_with_activation.3} parent=11 // pred_region
        _
      $region20: #{gated_conv2d_with_activation.3} parent=11 // pred_fallthru
        _
      // Predicated region
      $region21: #{gated_conv2d_with_activation.3} parent=11 // pred_check
        %p168 = pneg %p100
      $region22: #{gated_conv2d_with_activation.3} parent=11 // pred_check_branch
        %170 = sbr.rel (%p168) target = $region24
      $region23: #{gated_conv2d_with_activation.3} parent=11 // pred_region
        _
      $region24: #{gated_conv2d_with_activation.3} parent=11 // pred_fallthru
        _
      // Predicated region
      $region25: #{gated_conv2d_with_activation.3} parent=11 // pred_check
        %p171 = pneg %p121
      $region26: #{gated_conv2d_with_activation.3} parent=11 // pred_check_branch
        %173 = sbr.rel (%p171) target = $region28
      $region27: #{gated_conv2d_with_activation.3} parent=11 // pred_region
        _
      $region28: #{gated_conv2d_with_activation.3} parent=11 // pred_fallthru
        _
    $region12: #{gated_conv2d_with_activation.3} parent=5 // pred_fallthru
      _
    %p174 = scmp.lt.s32.totalorder %s11, 4
    // Predicated region
    $region29: #{gated_conv2d_with_activation.3} parent=5 // pred_check
      %p175 = pneg %p174
    $region30: #{gated_conv2d_with_activation.3} parent=5 // pred_check_branch
      %177 = sbr.rel (%p175) target = $region32
    $region31: #{gated_conv2d_with_activation.3} parent=5 // pred_region
      // Predicated region
      $region33: #{gated_conv2d_with_activation.3} parent=31 // pred_check
        %p178 = pneg %p31
      $region34: #{gated_conv2d_with_activation.3} parent=31 // pred_check_branch
        %180 = sbr.rel (%p178) target = $region36
      $region35: #{gated_conv2d_with_activation.3} parent=31 // pred_region
        %s181 = smul.u32 16, %s11
        %p182 = scmp.lt.s32.totalorder %s181, 63
        %s183 = scalar_select %p182, %s181, 63
        %s184 = smul.addr %s183, 8
        %s185 = scalar_lea.vmem %s0, %s184
        %s186 = smul.u32 16, %s11
      $region36: #{gated_conv2d_with_activation.3} parent=31 // pred_fallthru
        _
    $region32: #{gated_conv2d_with_activation.3} parent=5 // pred_fallthru
      _
    %p187 = scmp.le.s32.totalorder 1, %s11
    %p188 = scmp.lt.s32.totalorder %s11, 5
    %p189 = pnand %p187, %p188
    %p190 = pneg %p189
    // Predicated region
    $region37: #{gated_conv2d_with_activation.3} parent=5 // pred_check
      _
    $region38: #{gated_conv2d_with_activation.3} parent=5 // pred_check_branch
      %192 = sbr.rel (%p189) target = $region40
    $region39: #{gated_conv2d_with_activation.3} parent=5 // pred_region
      %s193 = ssub.s32 %s11, 1
      %s194 = smul.u32 16, %s16
      %p195 = scmp.lt.s32.totalorder %s194, 63
      %s196 = scalar_select %p195, %s194, 63
      %s197 = smul.addr %s196, 8
      %s198 = scalar_lea.vmem %s0, %s197
      %p199 = pneg %p37
      %p200 = pneg %p34
      %p201 = pneg %p58
      %p202 = pneg %p55
      %p203 = pneg %p79
      %p204 = pneg %p76
      %p205 = pneg %p100
      %p206 = pneg %p97
      %p207 = pneg %p121
      %p208 = pneg %p118
      %p209 = pneg %p147
      %p210 = pneg %p144
      %s211 = smul.u32 16, %s16
      %p212 = scmp.lt.s32.totalorder %s211, 63
      %s213 = scalar_select %p212, %s211, 63
      %s214 = smul.addr %s213, 8
      %s215 = scalar_lea.vmem %s5, %s214
      %s216 = smul.u32 16, %s16
      %p217 = scmp.lt.s32.totalorder %s216, 63
      %s218 = scalar_select %p217, %s216, 63
      %s219 = smul.addr %s218, 8
      %s220 = scalar_lea.vmem %s0, %s219
      %s221 = smul.u32 16, %s16
      %s222 = smul.u32 16, %s16
      %p223 = scmp.lt.s32.totalorder %s222, 63
      %s224 = scalar_select %p223, %s222, 63
      %s225 = smul.addr %s224, 8
      %s226 = scalar_lea.vmem %s5, %s225
      %s227 = smul.u32 16, %s16
      %v228 = vld [vmem:[%s1] sm:$0x1]
      %v229 = vmul.f32 %v228, 0.001953125
      %v230 = vld [vmem:[%s2] sm:$0x1]
      %v231 = vmul.f32 %v230, 0.001953125
      %v232 = vmul.f32 %v229, %v229
      %v233 = vsub.f32 %v231, %v232
      %v234 = vmax.f32 %v233, 0.0
      %v235 = vld [vmem:[%s3] sm:$0x1]
      %v236 = vadd.f32 %v234, 1e-05
      %v237 = vrsqrt.pop %v236
      %v238 = vmul.f32 %v235, %v237
      %v239 = vld [vmem:[%s4] sm:$0x1]
      %v240 = vmul.f32 %v229, %v238
      %v241 = vsub.f32 %v239, %v240
      %v242 = vld [vmem:[%s220] sm:$0xff]
      %v243 = vld [vmem:[%s220 + $0x8] sm:$0xff]
      %v244 = vld [vmem:[%s220 + $0x10] sm:$0xff]
      %v245 = vld [vmem:[%s220 + $0x18] sm:$0xff]
      %v246 = vld [vmem:[%s220 + $0x20] sm:$0xff]
      %v247 = vld [vmem:[%s220 + $0x28] sm:$0xff]
      %v248 = vld [vmem:[%s220 + $0x30] sm:$0xff]
      %v249 = vld [vmem:[%s220 + $0x38] sm:$0xff]
      %v250 = vld [vmem:[%s220 + $0x40] sm:$0xff]
      %v251 = vld [vmem:[%s220 + $0x48] sm:$0xff]
      %v252 = vld [vmem:[%s220 + $0x50] sm:$0xff]
      %v253 = vld [vmem:[%s220 + $0x58] sm:$0xff]
      %v254 = vld [vmem:[%s220 + $0x60] sm:$0xff]
      %v255 = vld [vmem:[%s220 + $0x68] sm:$0xff]
      %v256 = vld [vmem:[%s220 + $0x70] sm:$0xff]
      %v257 = vld [vmem:[%s220 + $0x78] sm:$0xff]
      %v259 = vlaneseq
      %v260 = vshrl.u32 %v259, 7
      %v261 = vsub.s32 0, %v260
      %v262 = vrot.slane %v238, %v261
      %v264 = vmul.f32 %v242, %v262
      %v265 = vmul.f32 %v243, %v262
      %v266 = vmul.f32 %v244, %v262
      %v267 = vmul.f32 %v245, %v262
      %v268 = vmul.f32 %v246, %v262
      %v269 = vmul.f32 %v247, %v262
      %v270 = vmul.f32 %v248, %v262
      %v271 = vmul.f32 %v249, %v262
      %v272 = vmul.f32 %v250, %v262
      %v273 = vmul.f32 %v251, %v262
      %v274 = vmul.f32 %v252, %v262
      %v275 = vmul.f32 %v253, %v262
      %v276 = vmul.f32 %v254, %v262
      %v277 = vmul.f32 %v255, %v262
      %v278 = vmul.f32 %v256, %v262
      %v279 = vmul.f32 %v257, %v262
      %v281 = vlaneseq
      %v282 = vshrl.u32 %v281, 7
      %v283 = vsub.s32 0, %v282
      %v284 = vrot.slane %v241, %v283
      %v286 = vadd.f32 %v264, %v284
      %v287 = vadd.f32 %v265, %v284
      %v288 = vadd.f32 %v266, %v284
      %v289 = vadd.f32 %v267, %v284
      %v290 = vadd.f32 %v268, %v284
      %v291 = vadd.f32 %v269, %v284
      %v292 = vadd.f32 %v270, %v284
      %v293 = vadd.f32 %v271, %v284
      %v294 = vadd.f32 %v272, %v284
      %v295 = vadd.f32 %v273, %v284
      %v296 = vadd.f32 %v274, %v284
      %v297 = vadd.f32 %v275, %v284
      %v298 = vadd.f32 %v276, %v284
      %v299 = vadd.f32 %v277, %v284
      %v300 = vadd.f32 %v278, %v284
      %v301 = vadd.f32 %v279, %v284
      %302 = vst [vmem:[%s226] sm:$0xff] %v286
      %303 = vst [vmem:[%s226 + $0x8] sm:$0xff] %v287
      %304 = vst [vmem:[%s226 + $0x10] sm:$0xff] %v288
      %305 = vst [vmem:[%s226 + $0x18] sm:$0xff] %v289
      %306 = vst [vmem:[%s226 + $0x20] sm:$0xff] %v290
      %307 = vst [vmem:[%s226 + $0x28] sm:$0xff] %v291
      %308 = vst [vmem:[%s226 + $0x30] sm:$0xff] %v292
      %309 = vst [vmem:[%s226 + $0x38] sm:$0xff] %v293
      %310 = vst [vmem:[%s226 + $0x40] sm:$0xff] %v294
      %311 = vst [vmem:[%s226 + $0x48] sm:$0xff] %v295
      %312 = vst [vmem:[%s226 + $0x50] sm:$0xff] %v296
      %313 = vst [vmem:[%s226 + $0x58] sm:$0xff] %v297
      %314 = vst [vmem:[%s226 + $0x60] sm:$0xff] %v298
      %315 = vst [vmem:[%s226 + $0x68] sm:$0xff] %v299
      %316 = vst [vmem:[%s226 + $0x70] sm:$0xff] %v300
      %317 = vst [vmem:[%s226 + $0x78] sm:$0xff] %v301
      %s318 = smul.u32 16, %s16
      %p319 = scmp.lt.s32.totalorder %s318, 63
      %s320 = scalar_select %p319, %s318, 63
      %s321 = smul.addr %s320, 8
      %s322 = scalar_lea.vmem %s5, %s321
      // Predicated region
      $region41: #{gated_conv2d_with_activation.3} parent=39 // pred_check
        %p323 = pneg %p144
      $region42: #{gated_conv2d_with_activation.3} parent=39 // pred_check_branch
        %325 = sbr.rel (%p323) target = $region44
      $region43: #{gated_conv2d_with_activation.3} parent=39 // pred_region
        %s326 = smul.u32 16, %s16
      $region44: #{gated_conv2d_with_activation.3} parent=39 // pred_fallthru
        _
    $region40: #{gated_conv2d_with_activation.3} parent=5 // pred_fallthru
      _
    %p327 = scmp.le.s32.totalorder 2, %s11
    // Predicated region
    $region45: #{gated_conv2d_with_activation.3} parent=5 // pred_check
      %p328 = pneg %p327
    $region46: #{gated_conv2d_with_activation.3} parent=5 // pred_check_branch
      %330 = sbr.rel (%p328) target = $region48
    $region47: #{gated_conv2d_with_activation.3} parent=5 // pred_region
      %s331 = ssub.s32 %s11, 2
      // Predicated region
      $region49: #{gated_conv2d_with_activation.3} parent=47 // pred_check
        %p332 = pneg %p150
      $region50: #{gated_conv2d_with_activation.3} parent=47 // pred_check_branch
        %334 = sbr.rel (%p332) target = $region52
      $region51: #{gated_conv2d_with_activation.3} parent=47 // pred_region
        %s335 = smul.u32 16, %s17
        %p336 = scmp.lt.s32.totalorder %s335, 63
        %s337 = scalar_select %p336, %s335, 63
        %s338 = smul.addr %s337, 8
        %s339 = scalar_lea.vmem %s5, %s338
      $region52: #{gated_conv2d_with_activation.3} parent=47 // pred_fallthru
        _
    $region48: #{gated_conv2d_with_activation.3} parent=5 // pred_fallthru
      _
  $region6: #{gated_conv2d_with_activation.3} parent=0 // loop_footer
    %s15 = sadd.s32 1, %s11
  $region7: #{gated_conv2d_with_activation.3} parent=0 // loop_footer_branch
    %10 = sbr.rel target = $region3
  $region8: #{gated_conv2d_with_activation.3} parent=0 // loop_exit
    _

// kernel: gated_conv2d_with_activation.2
$region0: #{gated_conv2d_with_activation.2}
  #allocation0 [shape = 'u32[]', space=smem, size = 0x4, offset = 0x4, fixed_abs, tag = 'smem constant byte address 0x4 - core index']
  #allocation1 [shape = 'u32[144,128]{1,0:T(1,128)}', space=vmem, size = 0x12000, scoped, tag = 'internal scratch']
  %s0 = inlined_call_operand.vmem [shape: bf16[512,36], index: 0, kind: input, shape index: {}]
  %s1 = inlined_call_operand.vmem [shape: bf16[36,256], index: 1, kind: input, shape index: {}]
  %s2 = inlined_call_operand.vmem [shape: f32[1,256], index: 2, kind: input, shape index: {}]
  %s3 = inlined_call_operand.vmem [shape: f32[512,128], index: 3, kind: output, shape index: {0}]
  %s4 = inlined_call_operand.vmem [shape: f32[1,128], index: 4, kind: output, shape index: {1}]
  %s5 = inlined_call_operand.vmem [shape: f32[1,128], index: 5, kind: output, shape index: {2}]
  %6 = xla_tuple %s3, %s4, %s5
  %s7 = sld [smem:[#allocation0]]
  $region65: #{gated_conv2d_with_activation.2} parent=0
    _
  %s9 = ssub.s32 1, %s7
  %s10 = scalar_select 0, %s9, %s7
  loop: start=0, step=1, limit=6
  $region2: #{gated_conv2d_with_activation.2} parent=0 // loop_pre_header
    _
  $region3: #{gated_conv2d_with_activation.2} parent=0 // loop_header
    %s12 = sphi 0, %s16
    %p13 = scmp.ge.s32.totalorder %s12, 6
    %s22 = sphi 0, %s24
    %s25 = sphi 0, %s22
    %s26 = sphi 0, %s25
    %s42 = sphi 0, %s26
    %s46 = sphi 0, %s46
    %s48 = sphi 0, %s46
    %s49 = sphi 0, %s48
    %s63 = sphi 0, %s49
    %s67 = sphi 0, %s67
    %s69 = sphi 0, %s67
    %s70 = sphi 0, %s69
    %s84 = sphi 0, %s70
    %s90 = sphi 0, %s92
    %s93 = sphi 0, %s90
    %s94 = sphi 0, %s93
    %s110 = sphi 0, %s94
    %s114 = sphi 0, %s114
    %s116 = sphi 0, %s114
    %s117 = sphi 0, %s116
    %s131 = sphi 0, %s117
    %s135 = sphi 0, %s135
    %s137 = sphi 0, %s135
    %s138 = sphi 0, %s137
    %s152 = sphi 0, %s138
  $region4: #{gated_conv2d_with_activation.2} parent=0 // loop_header_branch
    %15 = sbr.rel (%p13) target = $region8
  $region5: #{gated_conv2d_with_activation.2} parent=0 // loop_body
    %s17 = ssub.s32 %s12, 1
    %s18 = ssub.s32 %s12, 2
    %s19 = sadd.s32 %s12, 1
    %s20 = ssub.s32 %s12, %s19
    %p21 = scmp.eq.s32.totalorder %s20, 0
    %s23 = sadd.s32 %s22, 1
    %s24 = scalar_select %p21, %s22, %s23
    %p27 = pneg %p21
    %p28 = scmp.eq.s32.totalorder %s12, 3
    %p29 = por %p27, %p28
    %p30 = scmp.ne.s32.totalorder %s22, %s25
    %p31 = scmp.eq.s32.totalorder %s12, 0
    %p32 = por %p30, %p31
    %p33 = scmp.ne.s32.totalorder %s22, %s25
    %p34 = scmp.eq.s32.totalorder %s17, 3
    %p35 = por %p33, %p34
    %p36 = scmp.ne.s32.totalorder %s25, %s26
    %p37 = scmp.eq.s32.totalorder %s17, 0
    %p38 = por %p36, %p37
    %p39 = scmp.ne.s32.totalorder %s25, %s26
    %p40 = scmp.eq.s32.totalorder %s18, 3
    %p41 = por %p39, %p40
    %p43 = scmp.ne.s32.totalorder %s26, %s42
    %p44 = scmp.eq.s32.totalorder %s18, 0
    %p45 = por %p43, %p44
    %s47 = sadd.s32 %s46, 1
    %p50 = scmp.eq.s32.totalorder %s12, 3
    %p51 = scmp.ne.s32.totalorder %s46, %s48
    %p52 = scmp.eq.s32.totalorder %s12, 0
    %p53 = por %p51, %p52
    %p54 = scmp.ne.s32.totalorder %s46, %s48
    %p55 = scmp.eq.s32.totalorder %s17, 3
    %p56 = por %p54, %p55
    %p57 = scmp.ne.s32.totalorder %s48, %s49
    %p58 = scmp.eq.s32.totalorder %s17, 0
    %p59 = por %p57, %p58
    %p60 = scmp.ne.s32.totalorder %s48, %s49
    %p61 = scmp.eq.s32.totalorder %s18, 3
    %p62 = por %p60, %p61
    %p64 = scmp.ne.s32.totalorder %s49, %s63
    %p65 = scmp.eq.s32.totalorder %s18, 0
    %p66 = por %p64, %p65
    %s68 = sadd.s32 %s67, 1
    %p71 = scmp.eq.s32.totalorder %s12, 3
    %p72 = scmp.ne.s32.totalorder %s67, %s69
    %p73 = scmp.eq.s32.totalorder %s12, 0
    %p74 = por %p72, %p73
    %p75 = scmp.ne.s32.totalorder %s67, %s69
    %p76 = scmp.eq.s32.totalorder %s17, 3
    %p77 = por %p75, %p76
    %p78 = scmp.ne.s32.totalorder %s69, %s70
    %p79 = scmp.eq.s32.totalorder %s17, 0
    %p80 = por %p78, %p79
    %p81 = scmp.ne.s32.totalorder %s69, %s70
    %p82 = scmp.eq.s32.totalorder %s18, 3
    %p83 = por %p81, %p82
    %p85 = scmp.ne.s32.totalorder %s70, %s84
    %p86 = scmp.eq.s32.totalorder %s18, 0
    %p87 = por %p85, %p86
    %s88 = ssub.s32 %s12, %s19
    %p89 = scmp.eq.s32.totalorder %s88, 0
    %s91 = sadd.s32 %s90, 1
    %s92 = scalar_select %p89, %s90, %s91
    %p95 = pneg %p89
    %p96 = scmp.eq.s32.totalorder %s12, 3
    %p97 = por %p95, %p96
    %p98 = scmp.ne.s32.totalorder %s90, %s93
    %p99 = scmp.eq.s32.totalorder %s12, 0
    %p100 = por %p98, %p99
    %p101 = scmp.ne.s32.totalorder %s90, %s93
    %p102 = scmp.eq.s32.totalorder %s17, 3
    %p103 = por %p101, %p102
    %p104 = scmp.ne.s32.totalorder %s93, %s94
    %p105 = scmp.eq.s32.totalorder %s17, 0
    %p106 = por %p104, %p105
    %p107 = scmp.ne.s32.totalorder %s93, %s94
    %p108 = scmp.eq.s32.totalorder %s18, 3
    %p109 = por %p107, %p108
    %p111 = scmp.ne.s32.totalorder %s94, %s110
    %p112 = scmp.eq.s32.totalorder %s18, 0
    %p113 = por %p111, %p112
    %s115 = sadd.s32 %s114, 1
    %p118 = scmp.eq.s32.totalorder %s12, 3
    %p119 = scmp.ne.s32.totalorder %s114, %s116
    %p120 = scmp.eq.s32.totalorder %s12, 0
    %p121 = por %p119, %p120
    %p122 = scmp.ne.s32.totalorder %s114, %s116
    %p123 = scmp.eq.s32.totalorder %s17, 3
    %p124 = por %p122, %p123
    %p125 = scmp.ne.s32.totalorder %s116, %s117
    %p126 = scmp.eq.s32.totalorder %s17, 0
    %p127 = por %p125, %p126
    %p128 = scmp.ne.s32.totalorder %s116, %s117
    %p129 = scmp.eq.s32.totalorder %s18, 3
    %p130 = por %p128, %p129
    %p132 = scmp.ne.s32.totalorder %s117, %s131
    %p133 = scmp.eq.s32.totalorder %s18, 0
    %p134 = por %p132, %p133
    %s136 = sadd.s32 %s135, 1
    %p139 = scmp.eq.s32.totalorder %s12, 3
    %p140 = scmp.ne.s32.totalorder %s135, %s137
    %p141 = scmp.eq.s32.totalorder %s12, 0
    %p142 = por %p140, %p141
    %p143 = scmp.ne.s32.totalorder %s135, %s137
    %p144 = scmp.eq.s32.totalorder %s17, 3
    %p145 = por %p143, %p144
    %p146 = scmp.ne.s32.totalorder %s137, %s138
    %p147 = scmp.eq.s32.totalorder %s17, 0
    %p148 = por %p146, %p147
    %p149 = scmp.ne.s32.totalorder %s137, %s138
    %p150 = scmp.eq.s32.totalorder %s18, 3
    %p151 = por %p149, %p150
    %p153 = scmp.ne.s32.totalorder %s138, %s152
    %p154 = scmp.eq.s32.totalorder %s18, 0
    %p155 = por %p153, %p154
    %p156 = scmp.le.s32.totalorder 1, %s12
    %p157 = scmp.lt.s32.totalorder %s12, 5
    %p158 = pnand %p156, %p157
    %p159 = pneg %p158
    // Predicated region
    $region9: #{gated_conv2d_with_activation.2} parent=5 // pred_check
      _
    $region10: #{gated_conv2d_with_activation.2} parent=5 // pred_check_branch
      %161 = sbr.rel (%p158) target = $region12
    $region11: #{gated_conv2d_with_activation.2} parent=5 // pred_region
      %s162 = ssub.s32 %s12, 1
      // Predicated region
      $region13: #{gated_conv2d_with_activation.2} parent=11 // pred_check
        %p163 = pneg %p59
      $region14: #{gated_conv2d_with_activation.2} parent=11 // pred_check_branch
        %165 = sbr.rel (%p163) target = $region16
      $region15: #{gated_conv2d_with_activation.2} parent=11 // pred_region
        _
      $region16: #{gated_conv2d_with_activation.2} parent=11 // pred_fallthru
        _
      // Predicated region
      $region17: #{gated_conv2d_with_activation.2} parent=11 // pred_check
        %p166 = pneg %p80
      $region18: #{gated_conv2d_with_activation.2} parent=11 // pred_check_branch
        %168 = sbr.rel (%p166) target = $region20
      $region19: #{gated_conv2d_with_activation.2} parent=11 // pred_region
        _
      $region20: #{gated_conv2d_with_activation.2} parent=11 // pred_fallthru
        _
    $region12: #{gated_conv2d_with_activation.2} parent=5 // pred_fallthru
      _
    %p169 = scmp.lt.s32.totalorder %s12, 4
    // Predicated region
    $region21: #{gated_conv2d_with_activation.2} parent=5 // pred_check
      %p170 = pneg %p169
    $region22: #{gated_conv2d_with_activation.2} parent=5 // pred_check_branch
      %172 = sbr.rel (%p170) target = $region24
    $region23: #{gated_conv2d_with_activation.2} parent=5 // pred_region
      // Predicated region
      $region25: #{gated_conv2d_with_activation.2} parent=23 // pred_check
        %p173 = pneg %p32
      $region26: #{gated_conv2d_with_activation.2} parent=23 // pred_check_branch
        %175 = sbr.rel (%p173) target = $region28
      $region27: #{gated_conv2d_with_activation.2} parent=23 // pred_region
        %s176 = smul.u32 16, %s12
        %p177 = scmp.lt.s32.totalorder %s176, 63
        %s178 = scalar_select %p177, %s176, 63
        %s179 = smul.addr %s178, 4
        %s180 = scalar_lea.vmem %s0, %s179
        %s181 = smul.u32 16, %s12
      $region28: #{gated_conv2d_with_activation.2} parent=23 // pred_fallthru
        _
    $region24: #{gated_conv2d_with_activation.2} parent=5 // pred_fallthru
      _
    %p182 = scmp.le.s32.totalorder 1, %s12
    %p183 = scmp.lt.s32.totalorder %s12, 5
    %p184 = pnand %p182, %p183
    %p185 = pneg %p184
    // Predicated region
    $region29: #{gated_conv2d_with_activation.2} parent=5 // pred_check
      _
    $region30: #{gated_conv2d_with_activation.2} parent=5 // pred_check_branch
      %187 = sbr.rel (%p184) target = $region32
    $region31: #{gated_conv2d_with_activation.2} parent=5 // pred_region
      %s188 = ssub.s32 %s12, 1
      %s189 = smul.u32 16, %s17
      %p190 = scmp.lt.s32.totalorder %s189, 63
      %s191 = scalar_select %p190, %s189, 63
      %s192 = smul.addr %s191, 4
      %s193 = scalar_lea.vmem %s0, %s192
      %p194 = pneg %p38
      %p195 = pneg %p35
      %p196 = pneg %p59
      %p197 = pneg %p56
      %p198 = pneg %p80
      %p199 = pneg %p77
      %p200 = pneg %p106
      %p201 = pneg %p103
      %s202 = smul.u32 16, %s17
      %p203 = scmp.lt.s32.totalorder %s202, 63
      %s204 = scalar_select %p203, %s202, 63
      %s205 = smul.addr %s204, 8
      %s206 = scalar_lea.vmem %s3, %s205
      %p207 = pneg %p127
      %p208 = pneg %p124
      %p209 = pneg %p148
      %p210 = pneg %p145
      %s211 = smul.u32 16, %s17
      %p212 = scmp.lt.s32.totalorder %s211, 63
      %s213 = scalar_select %p212, %s211, 63
      %s214 = smul.addr %s213, 4
      %s215 = scalar_lea.vmem %s0, %s214
      %s216 = smul.u32 16, %s17
      %s217 = smul.u32 16, %s17
      %p218 = scmp.lt.s32.totalorder %s217, 63
      %s219 = scalar_select %p218, %s217, 63
      %s220 = smul.addr %s219, 8
      %s221 = scalar_lea.vmem %s3, %s220
      %s222 = smul.u32 16, %s17
      %p224 = scmp.eq.s32.totalorder %s17, 0
      // Predicated region
      $region33: #{gated_conv2d_with_activation.2} parent=31 // pred_check
        %p225 = pneg %p224
      $region34: #{gated_conv2d_with_activation.2} parent=31 // pred_check_branch
        %227 = sbr.rel (%p225) target = $region36
      $region35: #{gated_conv2d_with_activation.2} parent=31 // pred_region
        %228 = vst [vmem:[%s4] sm:$0x1] 0.0
        %229 = vst [vmem:[%s5] sm:$0x1] 0.0
      $region36: #{gated_conv2d_with_activation.2} parent=31 // pred_fallthru
        _
      %v230 = vld [vmem:[%s215] sm:$0xf]
      %v231 = vld [vmem:[%s215 + $0x4] sm:$0xf]
      %v232 = vld [vmem:[%s215 + $0x8] sm:$0xf]
      %v233 = vld [vmem:[%s215 + $0xc] sm:$0xf]
      %v234 = vld [vmem:[%s215 + $0x10] sm:$0xf]
      %v235 = vld [vmem:[%s215 + $0x14] sm:$0xf]
      %v236 = vld [vmem:[%s215 + $0x18] sm:$0xf]
      %v237 = vld [vmem:[%s215 + $0x1c] sm:$0xf]
      %v238 = vld [vmem:[%s215 + $0x20] sm:$0xf]
      %v239 = vld [vmem:[%s215 + $0x24] sm:$0xf]
      %v240 = vld [vmem:[%s215 + $0x28] sm:$0xf]
      %v241 = vld [vmem:[%s215 + $0x2c] sm:$0xf]
      %v242 = vld [vmem:[%s215 + $0x30] sm:$0xf]
      %v243 = vld [vmem:[%s215 + $0x34] sm:$0xf]
      %v244 = vld [vmem:[%s215 + $0x38] sm:$0xf]
      %v245 = vld [vmem:[%s215 + $0x3c] sm:$0xf]
      %v246 = vld [vmem:[%s1] sm:$0xff]
      %v247 = vld [vmem:[%s1 + $0x8] sm:$0xff]
      %v248 = vld [vmem:[%s1 + $0x10] sm:$0xff]
      %v249 = vld [vmem:[%s1 + $0x18] sm:$0xff]
      %v250 = vld [vmem:[%s1 + $0x20] sm:$0x33]
      %v251 = vld [vmem:[%s2] sm:$0x3]
      %v253 = vlaneseq
      %v254 = vshrl.u32 %v253, 7
      %v255 = vsub.s32 0, %v254
      %v256 = vrot.slane %v251, %v255
      %v257 = vlaneseq
      %v258 = vshrl.u32 %v257, 7
      %v259 = vsub.s32 1, %v258
      %v260 = vrot.slane %v251, %v259
      %v279 = vunpack.c.l.b16 %v230
      %v280 = vunpack.c.l.b16 %v231
      %v281 = vunpack.c.l.b16 %v232
      %v282 = vunpack.c.l.b16 %v233
      %v283 = vunpack.c.l.b16 %v234
      %v284 = vunpack.c.l.b16 %v235
      %v285 = vunpack.c.l.b16 %v236
      %v286 = vunpack.c.l.b16 %v237
      %v287 = vunpack.c.l.b16 %v238
      %v288 = vunpack.c.l.b16 %v239
      %v289 = vunpack.c.l.b16 %v240
      %v290 = vunpack.c.l.b16 %v241
      %v291 = vunpack.c.l.b16 %v242
      %v292 = vunpack.c.l.b16 %v243
      %v293 = vunpack.c.l.b16 %v244
      %v294 = vunpack.c.l.b16 %v245
      %v295 = vpack.c.b16 %v280, %v279
      %v296 = vpack.c.b16 %v282, %v281
      %v297 = vpack.c.b16 %v284, %v283
      %v298 = vpack.c.b16 %v286, %v285
      %v299 = vpack.c.b16 %v288, %v287
      %v300 = vpack.c.b16 %v290, %v289
      %v301 = vpack.c.b16 %v292, %v291
      %v302 = vpack.c.b16 %v294, %v293
      %v308 = vunpack.c.l.b16 %v246
      %v309 = vunpack.c.h.b16 %v246
      %v310 = vunpack.c.l.b16 %v247
      %v311 = vunpack.c.h.b16 %v247
      %v312 = vunpack.c.l.b16 %v248
      %v313 = vunpack.c.h.b16 %v248
      %v314 = vunpack.c.l.b16 %v249
      %v315 = vunpack.c.h.b16 %v249
      %v316 = vunpack.c.l.b16 %v250
      %v317 = vunpack.c.h.b16 %v250
      %v318 = vpack.c.b16 %v310, %v308
      %v319 = vpack.c.b16 %v311, %v309
      %v320 = vpack.c.b16 %v314, %v312
      %v321 = vpack.c.b16 %v315, %v313
      %v322 = vpack.c.b16 %v316, %v316
      %v323 = vpack.c.b16 %v317, %v317
      %vm328 = vcmask 293888
      %v330 = vsel %vm328, %v295, 0
      %v333 = vsel %vm328, %v296, 0
      %v336 = vsel %vm328, %v297, 0
      %v339 = vsel %vm328, %v298, 0
      %v342 = vsel %vm328, %v299, 0
      %v345 = vsel %vm328, %v300, 0
      %v348 = vsel %vm328, %v301, 0
      %v351 = vsel %vm328, %v302, 0
      %vm353 = vcmask 1041408
      %v355 = vsel %vm353, %v322, 0
      %v358 = vsel %vm353, %v323, 0
      %360 = vmatprep.subr.bf16.mxu0 %v319
      %361 = vmatpush1.bf16.msra.mxu0 %v318
      %362 = vmatprep.subr.bf16.mxu0 %v321
      %363 = vmatpush1.bf16.msra.mxu0 %v320
      %364 = vmatprep.subr.bf16.mxu0 %v358
      %365 = vmatpush1.bf16.msra.mxu0 %v355
      %366 = vmatprep.subr.bf16.mxu0 0
      %367 = vmatpush1.bf16.msra.mxu0 0
      %368 = vmatprep.subr.bf16.mxu0 0
      %369 = vmatpush1.bf16.msra.mxu0 0
      %370 = vmatprep.subr.bf16.mxu0 0
      %371 = vmatpush1.bf16.msra.mxu0 0
      %372 = vmatprep.subr.bf16.mxu0 0
      %373 = vmatpush1.bf16.msra.mxu0 0
      %374 = vmatprep.subr.bf16.mxu0 0
      %375 = vmatpush1.bf16.msra.mxu0 0
      %376 = vmatprep.subr.bf16.mxu0 0
      %377 = vmatpush1.bf16.msra.mxu0 0
      %378 = vmatprep.subr.bf16.mxu0 0
      %379 = vmatpush1.bf16.msra.mxu0 0
      %380 = vmatprep.subr.bf16.mxu0 0
      %381 = vmatpush1.bf16.msra.mxu0 0
      %382 = vmatprep.subr.bf16.mxu0 0
      %383 = vmatpush1.bf16.msra.mxu0 0
      %384 = vmatprep.subr.bf16.mxu0 0
      %385 = vmatpush1.bf16.msra.mxu0 0
      %386 = vmatprep.subr.bf16.mxu0 0
      %387 = vmatpush1.bf16.msra.mxu0 0
      %388 = vmatprep.subr.bf16.mxu0 0
      %389 = vmatpush1.bf16.msra.mxu0 0
      %390 = vmatprep.subr.bf16.mxu0 0
      %391 = vmatpush1.bf16.msra.mxu0 0
      %392 = vmatprep.mubr.bf16.mxu0 0
      %393 = vmatmul.mubr.bf16.gmra.mrb[0].mxu0 %v330
      %v394 = vpop.f32.mrb[0].mxu0
      %v395 = vadd.f32 %v256, %v394
      %v396 = vpop.f32.mrb[0].mxu0
      %v397 = vadd.f32 %v260, %v396
      %v398 = vpop.f32.mrb[0].mxu0
      %v399 = vadd.f32 %v256, %v398
      %v400 = vpop.f32.mrb[0].mxu0
      %v401 = vadd.f32 %v260, %v400
      %402 = vmatprep.mubr.bf16.mxu0 0
      %403 = vmatmul.mubr.bf16.gmra.mrb[0].mxu0 %v333
      %v404 = vpop.f32.mrb[0].mxu0
      %v405 = vadd.f32 %v256, %v404
      %v406 = vpop.f32.mrb[0].mxu0
      %v407 = vadd.f32 %v260, %v406
      %v408 = vpop.f32.mrb[0].mxu0
      %v409 = vadd.f32 %v256, %v408
      %v410 = vpop.f32.mrb[0].mxu0
      %v411 = vadd.f32 %v260, %v410
      %412 = vmatprep.mubr.bf16.mxu0 0
      %413 = vmatmul.mubr.bf16.gmra.mrb[0].mxu0 %v336
      %v414 = vpop.f32.mrb[0].mxu0
      %v415 = vadd.f32 %v256, %v414
      %v416 = vpop.f32.mrb[0].mxu0
      %v417 = vadd.f32 %v260, %v416
      %v418 = vpop.f32.mrb[0].mxu0
      %v419 = vadd.f32 %v256, %v418
      %v420 = vpop.f32.mrb[0].mxu0
      %v421 = vadd.f32 %v260, %v420
      %422 = vmatprep.mubr.bf16.mxu0 0
      %423 = vmatmul.mubr.bf16.gmra.mrb[0].mxu0 %v339
      %v424 = vpop.f32.mrb[0].mxu0
      %v425 = vadd.f32 %v256, %v424
      %v426 = vpop.f32.mrb[0].mxu0
      %v427 = vadd.f32 %v260, %v426
      %v428 = vpop.f32.mrb[0].mxu0
      %v429 = vadd.f32 %v256, %v428
      %v430 = vpop.f32.mrb[0].mxu0
      %v431 = vadd.f32 %v260, %v430
      %432 = vmatprep.mubr.bf16.mxu0 0
      %433 = vmatmul.mubr.bf16.gmra.mrb[0].mxu0 %v342
      %v434 = vpop.f32.mrb[0].mxu0
      %v435 = vadd.f32 %v256, %v434
      %v436 = vpop.f32.mrb[0].mxu0
      %v437 = vadd.f32 %v260, %v436
      %v438 = vpop.f32.mrb[0].mxu0
      %v439 = vadd.f32 %v256, %v438
      %v440 = vpop.f32.mrb[0].mxu0
      %v441 = vadd.f32 %v260, %v440
      %442 = vmatprep.mubr.bf16.mxu0 0
      %443 = vmatmul.mubr.bf16.gmra.mrb[0].mxu0 %v345
      %v444 = vpop.f32.mrb[0].mxu0
      %v445 = vadd.f32 %v256, %v444
      %v446 = vpop.f32.mrb[0].mxu0
      %v447 = vadd.f32 %v260, %v446
      %v448 = vpop.f32.mrb[0].mxu0
      %v449 = vadd.f32 %v256, %v448
      %v450 = vpop.f32.mrb[0].mxu0
      %v451 = vadd.f32 %v260, %v450
      %452 = vmatprep.mubr.bf16.mxu0 0
      %453 = vmatmul.mubr.bf16.gmra.mrb[0].mxu0 %v348
      %v454 = vpop.f32.mrb[0].mxu0
      %v455 = vadd.f32 %v256, %v454
      %v456 = vpop.f32.mrb[0].mxu0
      %v457 = vadd.f32 %v260, %v456
      %v458 = vpop.f32.mrb[0].mxu0
      %v459 = vadd.f32 %v256, %v458
      %v460 = vpop.f32.mrb[0].mxu0
      %v461 = vadd.f32 %v260, %v460
      %462 = vmatprep.mubr.bf16.mxu0 0
      %463 = vmatmul.mubr.bf16.gmra.mrb[0].mxu0 %v351
      %v464 = vpop.f32.mrb[0].mxu0
      %v465 = vadd.f32 %v256, %v464
      %v466 = vpop.f32.mrb[0].mxu0
      %v467 = vadd.f32 %v260, %v466
      %v468 = vpop.f32.mrb[0].mxu0
      %v469 = vadd.f32 %v256, %v468
      %v470 = vpop.f32.mrb[0].mxu0
      %v471 = vadd.f32 %v260, %v470
      %472 = vdwg.mxu0
      %vm473 = vcmp.ge.f32.partialorder %v395, 0.0
      %vm474 = vcmp.ge.f32.partialorder %v399, 0.0
      %vm475 = vcmp.ge.f32.partialorder %v405, 0.0
      %vm476 = vcmp.ge.f32.partialorder %v409, 0.0
      %vm477 = vcmp.ge.f32.partialorder %v415, 0.0
      %vm478 = vcmp.ge.f32.partialorder %v419, 0.0
      %vm479 = vcmp.ge.f32.partialorder %v425, 0.0
      %vm480 = vcmp.ge.f32.partialorder %v429, 0.0
      %vm481 = vcmp.ge.f32.partialorder %v435, 0.0
      %vm482 = vcmp.ge.f32.partialorder %v439, 0.0
      %vm483 = vcmp.ge.f32.partialorder %v445, 0.0
      %vm484 = vcmp.ge.f32.partialorder %v449, 0.0
      %vm485 = vcmp.ge.f32.partialorder %v455, 0.0
      %vm486 = vcmp.ge.f32.partialorder %v459, 0.0
      %vm487 = vcmp.ge.f32.partialorder %v465, 0.0
      %vm488 = vcmp.ge.f32.partialorder %v469, 0.0
      %v489 = vmul.f32 %v395, 0.4
      %v490 = vmul.f32 %v399, 0.4
      %v491 = vmul.f32 %v405, 0.4
      %v492 = vmul.f32 %v409, 0.4
      %v493 = vmul.f32 %v415, 0.4
      %v494 = vmul.f32 %v419, 0.4
      %v495 = vmul.f32 %v425, 0.4
      %v496 = vmul.f32 %v429, 0.4
      %v497 = vmul.f32 %v435, 0.4
      %v498 = vmul.f32 %v439, 0.4
      %v499 = vmul.f32 %v445, 0.4
      %v500 = vmul.f32 %v449, 0.4
      %v501 = vmul.f32 %v455, 0.4
      %v502 = vmul.f32 %v459, 0.4
      %v503 = vmul.f32 %v465, 0.4
      %v504 = vmul.f32 %v469, 0.4
      %v505 = vsel %vm473, %v395, %v489
      %v506 = vsel %vm474, %v399, %v490
      %v507 = vsel %vm475, %v405, %v491
      %v508 = vsel %vm476, %v409, %v492
      %v509 = vsel %vm477, %v415, %v493
      %v510 = vsel %vm478, %v419, %v494
      %v511 = vsel %vm479, %v425, %v495
      %v512 = vsel %vm480, %v429, %v496
      %v513 = vsel %vm481, %v435, %v497
      %v514 = vsel %vm482, %v439, %v498
      %v515 = vsel %vm483, %v445, %v499
      %v516 = vsel %vm484, %v449, %v500
      %v517 = vsel %vm485, %v455, %v501
      %v518 = vsel %vm486, %v459, %v502
      %v519 = vsel %vm487, %v465, %v503
      %v520 = vsel %vm488, %v469, %v504
      %v521 = vxor.u32 %v397, 2147483648
      %v522 = vxor.u32 %v401, 2147483648
      %v523 = vxor.u32 %v407, 2147483648
      %v524 = vxor.u32 %v411, 2147483648
      %v525 = vxor.u32 %v417, 2147483648
      %v526 = vxor.u32 %v421, 2147483648
      %v527 = vxor.u32 %v427, 2147483648
      %v528 = vxor.u32 %v431, 2147483648
      %v529 = vxor.u32 %v437, 2147483648
      %v530 = vxor.u32 %v441, 2147483648
      %v531 = vxor.u32 %v447, 2147483648
      %v532 = vxor.u32 %v451, 2147483648
      %v533 = vxor.u32 %v457, 2147483648
      %v534 = vxor.u32 %v461, 2147483648
      %v535 = vxor.u32 %v467, 2147483648
      %v536 = vxor.u32 %v471, 2147483648
      %v537 = vmul.f32 %v521, 1.442695
      %v538 = vpow.pop %v537
      %v539 = vmul.f32 %v522, 1.442695
      %v540 = vpow.pop %v539
      %v541 = vmul.f32 %v523, 1.442695
      %v542 = vpow.pop %v541
      %v543 = vmul.f32 %v524, 1.442695
      %v544 = vpow.pop %v543
      %v545 = vmul.f32 %v525, 1.442695
      %v546 = vpow.pop %v545
      %v547 = vmul.f32 %v526, 1.442695
      %v548 = vpow.pop %v547
      %v549 = vmul.f32 %v527, 1.442695
      %v550 = vpow.pop %v549
      %v551 = vmul.f32 %v528, 1.442695
      %v552 = vpow.pop %v551
      %v553 = vmul.f32 %v529, 1.442695
      %v554 = vpow.pop %v553
      %v555 = vmul.f32 %v530, 1.442695
      %v556 = vpow.pop %v555
      %v557 = vmul.f32 %v531, 1.442695
      %v558 = vpow.pop %v557
      %v559 = vmul.f32 %v532, 1.442695
      %v560 = vpow.pop %v559
      %v561 = vmul.f32 %v533, 1.442695
      %v562 = vpow.pop %v561
      %v563 = vmul.f32 %v534, 1.442695
      %v564 = vpow.pop %v563
      %v565 = vmul.f32 %v535, 1.442695
      %v566 = vpow.pop %v565
      %v567 = vmul.f32 %v536, 1.442695
      %v568 = vpow.pop %v567
      %v569 = vadd.f32 %v538, 1.0
      %v570 = vadd.f32 %v540, 1.0
      %v571 = vadd.f32 %v542, 1.0
      %v572 = vadd.f32 %v544, 1.0
      %v573 = vadd.f32 %v546, 1.0
      %v574 = vadd.f32 %v548, 1.0
      %v575 = vadd.f32 %v550, 1.0
      %v576 = vadd.f32 %v552, 1.0
      %v577 = vadd.f32 %v554, 1.0
      %v578 = vadd.f32 %v556, 1.0
      %v579 = vadd.f32 %v558, 1.0
      %v580 = vadd.f32 %v560, 1.0
      %v581 = vadd.f32 %v562, 1.0
      %v582 = vadd.f32 %v564, 1.0
      %v583 = vadd.f32 %v566, 1.0
      %v584 = vadd.f32 %v568, 1.0
      %v585 = vrcp.pop %v569
      %v586 = vmul.f32 1.0, %v585
      %v587 = vrcp.pop %v570
      %v588 = vmul.f32 1.0, %v587
      %v589 = vrcp.pop %v571
      %v590 = vmul.f32 1.0, %v589
      %v591 = vrcp.pop %v572
      %v592 = vmul.f32 1.0, %v591
      %v593 = vrcp.pop %v573
      %v594 = vmul.f32 1.0, %v593
      %v595 = vrcp.pop %v574
      %v596 = vmul.f32 1.0, %v595
      %v597 = vrcp.pop %v575
      %v598 = vmul.f32 1.0, %v597
      %v599 = vrcp.pop %v576
      %v600 = vmul.f32 1.0, %v599
      %v601 = vrcp.pop %v577
      %v602 = vmul.f32 1.0, %v601
      %v603 = vrcp.pop %v578
      %v604 = vmul.f32 1.0, %v603
      %v605 = vrcp.pop %v579
      %v606 = vmul.f32 1.0, %v605
      %v607 = vrcp.pop %v580
      %v608 = vmul.f32 1.0, %v607
      %v609 = vrcp.pop %v581
      %v610 = vmul.f32 1.0, %v609
      %v611 = vrcp.pop %v582
      %v612 = vmul.f32 1.0, %v611
      %v613 = vrcp.pop %v583
      %v614 = vmul.f32 1.0, %v613
      %v615 = vrcp.pop %v584
      %v616 = vmul.f32 1.0, %v615
      %v617 = vmul.f32 %v505, %v586
      %v618 = vmul.f32 %v506, %v588
      %v619 = vmul.f32 %v507, %v590
      %v620 = vmul.f32 %v508, %v592
      %v621 = vmul.f32 %v509, %v594
      %v622 = vmul.f32 %v510, %v596
      %v623 = vmul.f32 %v511, %v598
      %v624 = vmul.f32 %v512, %v600
      %v625 = vmul.f32 %v513, %v602
      %v626 = vmul.f32 %v514, %v604
      %v627 = vmul.f32 %v515, %v606
      %v628 = vmul.f32 %v516, %v608
      %v629 = vmul.f32 %v517, %v610
      %v630 = vmul.f32 %v518, %v612
      %v631 = vmul.f32 %v519, %v614
      %v632 = vmul.f32 %v520, %v616
      %633 = vst [vmem:[%s221] sm:$0xff] %v617
      %634 = vst [vmem:[%s221 + $0x8] sm:$0xff] %v618
      %635 = vst [vmem:[%s221 + $0x10] sm:$0xff] %v619
      %636 = vst [vmem:[%s221 + $0x18] sm:$0xff] %v620
      %637 = vst [vmem:[%s221 + $0x20] sm:$0xff] %v621
      %638 = vst [vmem:[%s221 + $0x28] sm:$0xff] %v622
      %639 = vst [vmem:[%s221 + $0x30] sm:$0xff] %v623
      %640 = vst [vmem:[%s221 + $0x38] sm:$0xff] %v624
      %641 = vst [vmem:[%s221 + $0x40] sm:$0xff] %v625
      %642 = vst [vmem:[%s221 + $0x48] sm:$0xff] %v626
      %643 = vst [vmem:[%s221 + $0x50] sm:$0xff] %v627
      %644 = vst [vmem:[%s221 + $0x58] sm:$0xff] %v628
      %645 = vst [vmem:[%s221 + $0x60] sm:$0xff] %v629
      %646 = vst [vmem:[%s221 + $0x68] sm:$0xff] %v630
      %647 = vst [vmem:[%s221 + $0x70] sm:$0xff] %v631
      %648 = vst [vmem:[%s221 + $0x78] sm:$0xff] %v632
      %s649 = smul.u32 %s17, 128
      %v650 = vlaneseq
      %v651 = vshrl.u32 %v650, 7
      %v652 = vadd.s32 %v651, 8
      %v653 = vadd.s32 %v651, 16
      %v654 = vadd.s32 %v651, 24
      %v655 = vadd.s32 %v651, 32
      %v656 = vadd.s32 %v651, 40
      %v657 = vadd.s32 %v651, 48
      %v658 = vadd.s32 %v651, 56
      %v659 = vadd.s32 %v651, 64
      %v660 = vadd.s32 %v651, 72
      %v661 = vadd.s32 %v651, 80
      %v662 = vadd.s32 %v651, 88
      %v663 = vadd.s32 %v651, 96
      %v664 = vadd.s32 %v651, 104
      %v665 = vadd.s32 %v651, 112
      %v666 = vadd.s32 %v651, 120
      %v667 = vstv %s649
      %v668 = vadd.s32 %v667, %v651
      %v669 = vadd.s32 %v667, %v652
      %v670 = vadd.s32 %v667, %v653
      %v671 = vadd.s32 %v667, %v654
      %v672 = vadd.s32 %v667, %v655
      %v673 = vadd.s32 %v667, %v656
      %v674 = vadd.s32 %v667, %v657
      %v675 = vadd.s32 %v667, %v658
      %v676 = vadd.s32 %v667, %v659
      %v677 = vadd.s32 %v667, %v660
      %v678 = vadd.s32 %v667, %v661
      %v679 = vadd.s32 %v667, %v662
      %v680 = vadd.s32 %v667, %v663
      %v681 = vadd.s32 %v667, %v664
      %v682 = vadd.s32 %v667, %v665
      %v683 = vadd.s32 %v667, %v666
      %vm684 = vcmp.lt.s32.totalorder %v668, 512
      %vm685 = vcmp.lt.s32.totalorder %v669, 512
      %vm686 = vcmp.lt.s32.totalorder %v670, 512
      %vm687 = vcmp.lt.s32.totalorder %v671, 512
      %vm688 = vcmp.lt.s32.totalorder %v672, 512
      %vm689 = vcmp.lt.s32.totalorder %v673, 512
      %vm690 = vcmp.lt.s32.totalorder %v674, 512
      %vm691 = vcmp.lt.s32.totalorder %v675, 512
      %vm692 = vcmp.lt.s32.totalorder %v676, 512
      %vm693 = vcmp.lt.s32.totalorder %v677, 512
      %vm694 = vcmp.lt.s32.totalorder %v678, 512
      %vm695 = vcmp.lt.s32.totalorder %v679, 512
      %vm696 = vcmp.lt.s32.totalorder %v680, 512
      %vm697 = vcmp.lt.s32.totalorder %v681, 512
      %vm698 = vcmp.lt.s32.totalorder %v682, 512
      %vm699 = vcmp.lt.s32.totalorder %v683, 512
      %v700 = vsel %vm684, 1, 0
      %v701 = vsel %vm685, 1, 0
      %v702 = vsel %vm686, 1, 0
      %v703 = vsel %vm687, 1, 0
      %v704 = vsel %vm688, 1, 0
      %v705 = vsel %vm689, 1, 0
      %v706 = vsel %vm690, 1, 0
      %v707 = vsel %vm691, 1, 0
      %v708 = vsel %vm692, 1, 0
      %v709 = vsel %vm693, 1, 0
      %v710 = vsel %vm694, 1, 0
      %v711 = vsel %vm695, 1, 0
      %v712 = vsel %vm696, 1, 0
      %v713 = vsel %vm697, 1, 0
      %v714 = vsel %vm698, 1, 0
      %v715 = vsel %vm699, 1, 0
      %vm716 = vcmp.eq.s32.totalorder %v700, 1
      %vm717 = vcmp.eq.s32.totalorder %v701, 1
      %vm718 = vcmp.eq.s32.totalorder %v702, 1
      %vm719 = vcmp.eq.s32.totalorder %v703, 1
      %vm720 = vcmp.eq.s32.totalorder %v704, 1
      %vm721 = vcmp.eq.s32.totalorder %v705, 1
      %vm722 = vcmp.eq.s32.totalorder %v706, 1
      %vm723 = vcmp.eq.s32.totalorder %v707, 1
      %vm724 = vcmp.eq.s32.totalorder %v708, 1
      %vm725 = vcmp.eq.s32.totalorder %v709, 1
      %vm726 = vcmp.eq.s32.totalorder %v710, 1
      %vm727 = vcmp.eq.s32.totalorder %v711, 1
      %vm728 = vcmp.eq.s32.totalorder %v712, 1
      %vm729 = vcmp.eq.s32.totalorder %v713, 1
      %vm730 = vcmp.eq.s32.totalorder %v714, 1
      %vm731 = vcmp.eq.s32.totalorder %v715, 1
      %v732 = vsel %vm716, %v617, 0.0
      %v733 = vsel %vm717, %v618, 0.0
      %v734 = vsel %vm718, %v619, 0.0
      %v735 = vsel %vm719, %v620, 0.0
      %v736 = vsel %vm720, %v621, 0.0
      %v737 = vsel %vm721, %v622, 0.0
      %v738 = vsel %vm722, %v623, 0.0
      %v739 = vsel %vm723, %v624, 0.0
      %v740 = vsel %vm724, %v625, 0.0
      %v741 = vsel %vm725, %v626, 0.0
      %v742 = vsel %vm726, %v627, 0.0
      %v743 = vsel %vm727, %v628, 0.0
      %v744 = vsel %vm728, %v629, 0.0
      %v745 = vsel %vm729, %v630, 0.0
      %v746 = vsel %vm730, %v631, 0.0
      %v747 = vsel %vm731, %v632, 0.0
      %v748 = vld [vmem:[%s4] sm:$0x1]
      %v749 = vadd.f32 %v732, %v733
      %v750 = vadd.f32 %v749, %v734
      %v751 = vadd.f32 %v750, %v735
      %v752 = vadd.f32 %v751, %v736
      %v753 = vadd.f32 %v752, %v737
      %v754 = vadd.f32 %v753, %v738
      %v755 = vadd.f32 %v754, %v739
      %v756 = vadd.f32 %v755, %v740
      %v757 = vadd.f32 %v756, %v741
      %v758 = vadd.f32 %v757, %v742
      %v759 = vadd.f32 %v758, %v743
      %v760 = vadd.f32 %v759, %v744
      %v761 = vadd.f32 %v760, %v745
      %v762 = vadd.f32 %v761, %v746
      %v763 = vadd.f32 %v762, %v747
      %v764 = vrot.slane %v763, 4
      %v765 = vadd.f32 %v763, %v764
      %v766 = vrot.slane %v765, 2
      %v767 = vadd.f32 %v765, %v766
      %v768 = vrot.slane %v767, 1
      %v769 = vadd.f32 %v767, %v768
      %v770 = vadd.f32 %v748, %v769
      %771 = vst [vmem:[%s4] sm:$0x1] %v770
      %v772 = vld [vmem:[%s5] sm:$0x1]
      %v773 = vmul.f32 %v732, %v732
      %v774 = vmul.f32 %v733, %v733
      %v775 = vmul.f32 %v734, %v734
      %v776 = vmul.f32 %v735, %v735
      %v777 = vmul.f32 %v736, %v736
      %v778 = vmul.f32 %v737, %v737
      %v779 = vmul.f32 %v738, %v738
      %v780 = vmul.f32 %v739, %v739
      %v781 = vmul.f32 %v740, %v740
      %v782 = vmul.f32 %v741, %v741
      %v783 = vmul.f32 %v742, %v742
      %v784 = vmul.f32 %v743, %v743
      %v785 = vmul.f32 %v744, %v744
      %v786 = vmul.f32 %v745, %v745
      %v787 = vmul.f32 %v746, %v746
      %v788 = vmul.f32 %v747, %v747
      %v789 = vadd.f32 %v773, %v774
      %v790 = vadd.f32 %v789, %v775
      %v791 = vadd.f32 %v790, %v776
      %v792 = vadd.f32 %v791, %v777
      %v793 = vadd.f32 %v792, %v778
      %v794 = vadd.f32 %v793, %v779
      %v795 = vadd.f32 %v794, %v780
      %v796 = vadd.f32 %v795, %v781
      %v797 = vadd.f32 %v796, %v782
      %v798 = vadd.f32 %v797, %v783
      %v799 = vadd.f32 %v798, %v784
      %v800 = vadd.f32 %v799, %v785
      %v801 = vadd.f32 %v800, %v786
      %v802 = vadd.f32 %v801, %v787
      %v803 = vadd.f32 %v802, %v788
      %v804 = vrot.slane %v803, 4
      %v805 = vadd.f32 %v803, %v804
      %v806 = vrot.slane %v805, 2
      %v807 = vadd.f32 %v805, %v806
      %v808 = vrot.slane %v807, 1
      %v809 = vadd.f32 %v807, %v808
      %v810 = vadd.f32 %v772, %v809
      %811 = vst [vmem:[%s5] sm:$0x1] %v810
      %s812 = smul.u32 16, %s17
      %p813 = scmp.lt.s32.totalorder %s812, 63
      %s814 = scalar_select %p813, %s812, 63
      %s815 = smul.addr %s814, 8
      %s816 = scalar_lea.vmem %s3, %s815
      // Predicated region
      $region37: #{gated_conv2d_with_activation.2} parent=31 // pred_check
        %p817 = pneg %p103
      $region38: #{gated_conv2d_with_activation.2} parent=31 // pred_check_branch
        %819 = sbr.rel (%p817) target = $region40
      $region39: #{gated_conv2d_with_activation.2} parent=31 // pred_region
        %s820 = smul.u32 16, %s17
      $region40: #{gated_conv2d_with_activation.2} parent=31 // pred_fallthru
        _
      // Predicated region
      $region41: #{gated_conv2d_with_activation.2} parent=31 // pred_check
        %p821 = pneg %p124
      $region42: #{gated_conv2d_with_activation.2} parent=31 // pred_check_branch
        %823 = sbr.rel (%p821) target = $region44
      $region43: #{gated_conv2d_with_activation.2} parent=31 // pred_region
        _
      $region44: #{gated_conv2d_with_activation.2} parent=31 // pred_fallthru
        _
      // Predicated region
      $region45: #{gated_conv2d_with_activation.2} parent=31 // pred_check
        %p824 = pneg %p145
      $region46: #{gated_conv2d_with_activation.2} parent=31 // pred_check_branch
        %826 = sbr.rel (%p824) target = $region48
      $region47: #{gated_conv2d_with_activation.2} parent=31 // pred_region
        _
      $region48: #{gated_conv2d_with_activation.2} parent=31 // pred_fallthru
        _
      // Predicated region
      $region49: #{gated_conv2d_with_activation.2} parent=31 // pred_check
        %p827 = pneg %p124
      $region50: #{gated_conv2d_with_activation.2} parent=31 // pred_check_branch
        %829 = sbr.rel (%p827) target = $region52
      $region51: #{gated_conv2d_with_activation.2} parent=31 // pred_region
        _
      $region52: #{gated_conv2d_with_activation.2} parent=31 // pred_fallthru
        _
      // Predicated region
      $region53: #{gated_conv2d_with_activation.2} parent=31 // pred_check
        %p830 = pneg %p145
      $region54: #{gated_conv2d_with_activation.2} parent=31 // pred_check_branch
        %832 = sbr.rel (%p830) target = $region56
      $region55: #{gated_conv2d_with_activation.2} parent=31 // pred_region
        _
      $region56: #{gated_conv2d_with_activation.2} parent=31 // pred_fallthru
        _
    $region32: #{gated_conv2d_with_activation.2} parent=5 // pred_fallthru
      _
    %p833 = scmp.le.s32.totalorder 2, %s12
    // Predicated region
    $region57: #{gated_conv2d_with_activation.2} parent=5 // pred_check
      %p834 = pneg %p833
    $region58: #{gated_conv2d_with_activation.2} parent=5 // pred_check_branch
      %836 = sbr.rel (%p834) target = $region60
    $region59: #{gated_conv2d_with_activation.2} parent=5 // pred_region
      %s837 = ssub.s32 %s12, 2
      // Predicated region
      $region61: #{gated_conv2d_with_activation.2} parent=59 // pred_check
        %p838 = pneg %p109
      $region62: #{gated_conv2d_with_activation.2} parent=59 // pred_check_branch
        %840 = sbr.rel (%p838) target = $region64
      $region63: #{gated_conv2d_with_activation.2} parent=59 // pred_region
        %s841 = smul.u32 16, %s18
        %p842 = scmp.lt.s32.totalorder %s841, 63
        %s843 = scalar_select %p842, %s841, 63
        %s844 = smul.addr %s843, 8
        %s845 = scalar_lea.vmem %s3, %s844
      $region64: #{gated_conv2d_with_activation.2} parent=59 // pred_fallthru
        _
    $region60: #{gated_conv2d_with_activation.2} parent=5 // pred_fallthru
      _
  $region6: #{gated_conv2d_with_activation.2} parent=0 // loop_footer
    %s16 = sadd.s32 1, %s12
  $region7: #{gated_conv2d_with_activation.2} parent=0 // loop_footer_branch
    %11 = sbr.rel target = $region3
  $region8: #{gated_conv2d_with_activation.2} parent=0 // loop_exit
    _

</llo_original>
